<compile_context>
chip_gen: v7x
topology: tpu7x:2x2x1
jax: 0.10.0
libtpu: 0.0.40
codegen_flags: <defaults>
</compile_context>

<pallas_src>
import functools

import jax
import jax.numpy as jnp
from jax.experimental import pallas as pl
from jax.experimental.pallas import tpu as pltpu


def _dyn_filter_kernel(x_ref, w_ref, mask_ref, o_ref, *, H, W):
    """One grid step = one (batch, channel-tile) lane-dense slab.

    x_ref    : VMEM (1, ct, H*W)   flattened input slab
    w_ref    : VMEM (1, ct, 10)    fused per-channel taps [0..8] + gap bias [9]
    mask_ref : VMEM (4, H*W)       int32 boundary masks [left, right, top, bot]
    o_ref    : VMEM (1, ct, H*W)
    """
    HW = H * W
    ct = x_ref.shape[1]
    x = x_ref[0].astype(jnp.float32)            # (ct, HW)
    w = w_ref[0].astype(jnp.float32)            # (ct, 10)

    # Boundary masks: broadcast the int32 rows to the full slab ONCE, compare
    # once, and reuse in all six selects (JAX does not CSE broadcast_in_dim).
    m = mask_ref[...]
    left = jnp.broadcast_to(m[0:1, :], (ct, HW)) != 0
    right = jnp.broadcast_to(m[1:2, :], (ct, HW)) != 0
    top = jnp.broadcast_to(m[2:3, :], (ct, HW)) != 0
    bot = jnp.broadcast_to(m[3:4, :], (ct, HW)) != 0

    lane_axis = x.ndim - 1                      # pltpu.roll needs axis >= 0

    def gather(a, s):
        # out[..., i] = a[..., (i + s) % HW]   (static s; XLU lane rotation)
        sh = (-s) % HW
        return a if sh == 0 else pltpu.roll(a, sh, lane_axis)

    # Column-reflected neighbours (dx = -1, 0, +1), built once.
    xm = gather(x, -1)                          # x[h, w-1]   (circular)
    xp = gather(x, +1)                          # x[h, w+1]   (circular)
    cols = (
        jnp.where(left, xp, xm),                # dx=-1: reflect -1 -> +1 at w==0
        x,                                      # dx= 0
        jnp.where(right, xm, xp),               # dx=+1: reflect W -> W-2 at w==W-1
    )

    # Accumulate the 9 fused dynamic-filter taps (A and the identity term are
    # already folded into the tap table by the wrapper).  F.unfold ordering is
    # t = (dy+1)*K + (dx+1).
    acc = None
    for j, cdx in enumerate(cols):              # j = dx + 1
        up = gather(cdx, -W)                    # row h-1 (circular)
        dn = gather(cdx, +W)                    # row h+1 (circular)
        rows = (
            jnp.where(top, dn, up),             # dy=-1: reflect -1 -> +1 at h==0
            cdx,                                # dy= 0
            jnp.where(bot, up, dn),             # dy=+1: reflect H -> H-2 at h==H-1
        )
        for i, tap in enumerate(rows):          # i = dy + 1
            t = i * 3 + j
            term = w[:, t:t + 1] * tap          # per-channel scalar taps
            acc = term if acc is None else acc + term

    # Column 9 holds ap*lamb_l*inside_all, precomputed per (B, C) in the
    # wrapper (no in-kernel spatial reduction).
    o_ref[0] = (acc - w[:, 9:10]).astype(o_ref.dtype)


def _dynamic_filter_weights(ap, conv_w, group, K, B):
    """Glue: (pooled x) -> 1x1 conv -> BN(eval) -> tanh -> (B, group, K*K)."""
    K2 = K * K
    C = ap.shape[1]
    lf = ap @ conv_w.reshape(group * K2, C).T              # 1x1 conv, no bias
    if B > 1:
        # eval-mode BatchNorm2d with default params: y = x / sqrt(var + eps)
        lf = lf * (1.0 / jnp.sqrt(1.0 + 1e-5))
    return jnp.tanh(lf).reshape(B, group, K2).astype(jnp.float32)


def _vmem_limit_and_budget():
    """Per-generation VMEM tuning.

    Scoped limit ~= 75% of physical VMEM (capped at 96 MiB), slab budget ~=
    limit/12 to leave headroom for double-buffered in/out blocks plus the
    ~8 slab-sized live temporaries (x, xm, xp, 3 cols, up/dn, acc)."""
    cap = 64 << 20                              # conservative (v7x) fallback
    try:
        cap = int(pltpu.get_tpu_info().vmem_capacity_bytes)
    except Exception:
        pass
    limit = min(cap * 3 // 4, 96 << 20)         # ~48 MiB on v7x, 96 MiB on v5e/v6e
    budget = max(2 << 20, limit // 12)          # ~4 MiB on v7x, ~8 MiB on v6e
    return limit, budget


def _pick_c_tile(C, HW, budget_bytes):
    """Largest multiple-of-8 channel tile whose (ct, HW) f32 slab fits budget."""
    def fits(ct):
        return ct * HW * 4 <= budget_bytes

    if fits(C):
        return C
    divs = [d for d in range(8, C, 8) if C % d == 0]
    fitting = [d for d in divs if fits(d)]
    if fitting:
        return max(fitting)
    if divs:
        return min(divs)        # smallest legal tile even if over budget
    return C                    # no multiple-of-8 divisor: single full-C block


def dynamic_filter_forward(x, conv_w, lamb_l, lamb_h, inside_all,
                           group=8, kernel_size=3, dilation=1):
    B, C, H, W = x.shape
    K = kernel_size
    K2 = K * K
    cgp = C // group
    HW = H * W
    if K != 3 or dilation != 1:
        # TODO(synk): in-kernel roll+reflect assumes a 1-pixel reflection
        # border (kernel_size=3, dilation=1, the module defaults).
        raise NotImplementedError("Pallas path supports kernel_size=3, dilation=1")

    # ---- tiny glue on (B, C)-sized tensors ----
    ap = jnp.mean(x.astype(jnp.float32), axis=(2, 3))             # (B, C) — reused below
    filt = _dynamic_filter_weights(ap, conv_w, group, K, B)       # (B, group, K2)
    filt_c = jnp.repeat(filt, cgp, axis=1)                        # (B, C, K2)

    ll = lamb_l.reshape(C).astype(jnp.float32)
    lh = lamb_h.reshape(C).astype(jnp.float32)
    ins = inside_all.reshape(C).astype(jnp.float32)
    a_c = ll * (ins + 1.0)                                        # on low_part
    b_c = ll * ins                                                # on gap
    c_c = lh + 1.0                                                # on identity x

    # Fuse: taps' = filt*A, centre tap += (lamb_h+1); bias = ap*lamb_l*ins.
    taps = filt_c * a_c[None, :, None]                            # (B, C, 9)
    taps = taps.at[:, :, K2 // 2].add(c_c[None, :])
    bias = ap * b_c[None, :]                                      # (B, C)
    table = jnp.concatenate([taps, bias[:, :, None]], axis=-1)    # (B, C, 10)
    table = table.astype(jnp.float32)

    # Boundary masks for the flattened spatial axis (computed once, 4*HW i32).
    idx = jnp.arange(HW, dtype=jnp.int32)
    col = idx % W
    row = idx // W
    masks = jnp.stack([col == 0, col == W - 1, row == 0, row == H - 1],
                      axis=0).astype(jnp.int32)                   # (4, HW)

    x_flat = x.reshape(B, C, HW)                                  # free reshape (contiguous)

    vmem_limit, budget = _vmem_limit_and_budget()
    ct = _pick_c_tile(C, HW, budget)
    nct = C // ct
    # v7x has 2 TensorCores: make sure the "parallel" grid has >= 2 steps.
    if B * nct < 2 and ct % 16 == 0:
        ct //= 2
        nct = C // ct

    kernel = functools.partial(_dyn_filter_kernel, H=H, W=W)
    out = pl.pallas_call(
        kernel,
        out_shape=jax.ShapeDtypeStruct((B, C, HW), x.dtype),
        grid=(B, nct),
        in_specs=[
            pl.BlockSpec((1, ct, HW), lambda b, c: (b, c, 0)),        # x slab (lane-dense)
            pl.BlockSpec((1, ct, K2 + 1), lambda b, c: (b, c, 0)),    # fused taps + bias
            pl.BlockSpec((4, HW), lambda b, c: (0, 0)),               # boundary masks
        ],
        out_specs=pl.BlockSpec((1, ct, HW), lambda b, c: (b, c, 0)),
        compiler_params=pltpu.CompilerParams(
            dimension_semantics=("parallel", "parallel"),
            vmem_limit_bytes=vmem_limit),
    )(x_flat, table, masks)
    return out.reshape(B, C, H, W)


def reference_forward(x, conv_w, lamb_l, lamb_h, inside_all,
                      group=8, kernel_size=3, dilation=1):
    """Pure-JAX reference (mirrors the PyTorch forward, eval-mode BN)."""
    B, C, H, W = x.shape
    K = kernel_size
    K2 = K * K
    cgp = C // group
    pad = dilation * (K - 1) // 2

    ap = jnp.mean(x, axis=(2, 3))                                   # (B, C)
    filt = _dynamic_filter_weights(ap, conv_w, group, K, B)         # (B, group, K2)
    xpad = jnp.pad(x, ((0, 0), (0, 0), (pad, pad), (pad, pad)), mode="reflect")
    patches = jnp.stack(
        [xpad[:, :, (t // K) * dilation:(t // K) * dilation + H,
                    (t % K) * dilation:(t % K) * dilation + W]
         for t in range(K2)], axis=2)                               # (B, C, K2, H, W)
    filt_c = jnp.repeat(filt, cgp, axis=1)                          # (B, C, K2)
    low_part = jnp.einsum("bcthw,bct->bchw", patches, filt_c)

    gap = jnp.mean(x, axis=(2, 3), keepdims=True)                   # (B, C, 1, 1)
    ins = inside_all.reshape(1, C, 1, 1)
    out_low = (low_part * (ins + 1.0) - ins * gap) * lamb_l.reshape(1, C, 1, 1)
    out_high = x * (lamb_h.reshape(1, C, 1, 1) + 1.0)
    return out_low + out_high


if __name__ == "__main__":
    B, C, H, W = 2, 16, 16, 16           # C must be divisible by group=8
    group, K = 8, 3

    key = jax.random.PRNGKey(0)
    k1, k2, k3, k4, k5 = jax.random.split(key, 5)

    x = jax.random.normal(k1, (B, C, H, W), jnp.float32)

    # conv weight: (group*K*K, C, 1, 1), kaiming_normal fan_out / relu
    fan_out = group * K * K
    conv_w = jax.random.normal(k2, (group * K * K, C, 1, 1), jnp.float32) * jnp.sqrt(2.0 / fan_out)

    # lamb_l / lamb_h / inside_all are zero-initialized in the PyTorch module
    # (which would make the output identical to x); use small deterministic
    # random values to actually exercise the compute path.
    lamb_l = 0.1 * jax.random.normal(k3, (C,), jnp.float32)
    lamb_h = 0.1 * jax.random.normal(k4, (C,), jnp.float32)
    inside_all = 0.1 * jax.random.normal(k5, (C, 1, 1), jnp.float32)

    out = dynamic_filter_forward(x, conv_w, lamb_l, lamb_h, inside_all,
                                 group=group, kernel_size=K, dilation=1)
    out = jax.block_until_ready(out)

    ref = reference_forward(x, conv_w, lamb_l, lamb_h, inside_all,
                            group=group, kernel_size=K, dilation=1)
    err = float(jnp.max(jnp.abs(out - ref)))
    assert out.shape == (B, C, H, W)
    if err > 1e-4:
        raise AssertionError(f"Pallas kernel mismatch vs reference, max abs err = {err}")
    print("KERNEL_OK")
</pallas_src>

<mosaic_0001>
module attributes {stable_mosaic.version = 11 : i64} {
  func.func @_dyn_filter_kernel(%arg0: i32, %arg1: i32, %arg2: memref<1x16x256xf32, #tpu.memory_space<vmem>>, %arg3: memref<1x16x10xf32, #tpu.memory_space<vmem>>, %arg4: memref<4x256xi32, #tpu.memory_space<vmem>>, %arg5: memref<1x16x256xf32, #tpu.memory_space<vmem>>) attributes {dimension_semantics = [#tpu.dimension_semantics<parallel>, #tpu.dimension_semantics<parallel>], iteration_bounds = array<i64: 2, 1>, scalar_prefetch = 0 : i64, scratch_operands = 0 : i64, tpu.core_type = #tpu.core_type<tc>, window_params = [{transform_indices = @transform_0, window_bounds = array<i64: 1, 16, 256>}, {transform_indices = @transform_1, window_bounds = array<i64: 1, 16, 10>}, {pipeline_mode = #tpu.pipeline_mode<synchronous>, transform_indices = @transform_2, window_bounds = array<i64: 4, 256>}, {transform_indices = @transform_3, window_bounds = array<i64: 1, 16, 256>}]} {
    %c0 = arith.constant 0 : index
    %c0_0 = arith.constant 0 : index
    %c0_1 = arith.constant 0 : index
    %0 = vector.load %arg2[%c0, %c0_0, %c0_1] : memref<1x16x256xf32, #tpu.memory_space<vmem>>, vector<1x16x256xf32>
    %1 = vector.shape_cast %0 : vector<1x16x256xf32> to vector<16x256xf32>
    %c0_2 = arith.constant 0 : index
    %c0_3 = arith.constant 0 : index
    %c0_4 = arith.constant 0 : index
    %2 = vector.load %arg3[%c0_2, %c0_3, %c0_4] : memref<1x16x10xf32, #tpu.memory_space<vmem>>, vector<1x16x10xf32>
    %3 = vector.shape_cast %2 : vector<1x16x10xf32> to vector<16x10xf32>
    %c0_5 = arith.constant 0 : index
    %c0_6 = arith.constant 0 : index
    %4 = vector.load %arg4[%c0_5, %c0_6] : memref<4x256xi32, #tpu.memory_space<vmem>>, vector<4x256xi32>
    %5 = vector.extract_strided_slice %4 {offsets = [0, 0], sizes = [1, 256], strides = [1, 1]} : vector<4x256xi32> to vector<1x256xi32>
    %6 = vector.shape_cast %5 : vector<1x256xi32> to vector<1x256xi32>
    %7 = vector.broadcast %6 : vector<1x256xi32> to vector<16x256xi32>
    %c0_i32 = arith.constant 0 : i32
    %8 = vector.broadcast %c0_i32 : i32 to vector<16x256xi32>
    %9 = arith.cmpi ne, %7, %8 : vector<16x256xi32>
    %10 = vector.extract_strided_slice %4 {offsets = [1, 0], sizes = [1, 256], strides = [1, 1]} : vector<4x256xi32> to vector<1x256xi32>
    %11 = vector.shape_cast %10 : vector<1x256xi32> to vector<1x256xi32>
    %12 = vector.broadcast %11 : vector<1x256xi32> to vector<16x256xi32>
    %c0_i32_7 = arith.constant 0 : i32
    %13 = vector.broadcast %c0_i32_7 : i32 to vector<16x256xi32>
    %14 = arith.cmpi ne, %12, %13 : vector<16x256xi32>
    %15 = vector.extract_strided_slice %4 {offsets = [2, 0], sizes = [1, 256], strides = [1, 1]} : vector<4x256xi32> to vector<1x256xi32>
    %16 = vector.shape_cast %15 : vector<1x256xi32> to vector<1x256xi32>
    %17 = vector.broadcast %16 : vector<1x256xi32> to vector<16x256xi32>
    %c0_i32_8 = arith.constant 0 : i32
    %18 = vector.broadcast %c0_i32_8 : i32 to vector<16x256xi32>
    %19 = arith.cmpi ne, %17, %18 : vector<16x256xi32>
    %20 = vector.extract_strided_slice %4 {offsets = [3, 0], sizes = [1, 256], strides = [1, 1]} : vector<4x256xi32> to vector<1x256xi32>
    %21 = vector.shape_cast %20 : vector<1x256xi32> to vector<1x256xi32>
    %22 = vector.broadcast %21 : vector<1x256xi32> to vector<16x256xi32>
    %c0_i32_9 = arith.constant 0 : i32
    %23 = vector.broadcast %c0_i32_9 : i32 to vector<16x256xi32>
    %24 = arith.cmpi ne, %22, %23 : vector<16x256xi32>
    %c1_i32 = arith.constant 1 : i32
    %25 = tpu.dynamic_rotate %1 by %c1_i32 dim 1 : vector<16x256xf32>, i32 -> vector<16x256xf32>
    %c255_i32 = arith.constant 255 : i32
    %26 = tpu.dynamic_rotate %1 by %c255_i32 dim 1 : vector<16x256xf32>, i32 -> vector<16x256xf32>
    %27 = arith.select %9, %26, %25 : vector<16x256xi1>, vector<16x256xf32>
    %28 = arith.select %14, %25, %26 : vector<16x256xi1>, vector<16x256xf32>
    %c16_i32 = arith.constant 16 : i32
    %29 = tpu.dynamic_rotate %27 by %c16_i32 dim 1 : vector<16x256xf32>, i32 -> vector<16x256xf32>
    %c240_i32 = arith.constant 240 : i32
    %30 = tpu.dynamic_rotate %27 by %c240_i32 dim 1 : vector<16x256xf32>, i32 -> vector<16x256xf32>
    %31 = arith.select %19, %30, %29 : vector<16x256xi1>, vector<16x256xf32>
    %32 = arith.select %24, %29, %30 : vector<16x256xi1>, vector<16x256xf32>
    %33 = vector.extract_strided_slice %3 {offsets = [0, 0], sizes = [16, 1], strides = [1, 1]} : vector<16x10xf32> to vector<16x1xf32>
    %34 = vector.broadcast %33 : vector<16x1xf32> to vector<16x256xf32>
    %35 = arith.mulf %34, %31 : vector<16x256xf32>
    %36 = vector.extract_strided_slice %3 {offsets = [0, 3], sizes = [16, 1], strides = [1, 1]} : vector<16x10xf32> to vector<16x1xf32>
    %37 = vector.broadcast %36 : vector<16x1xf32> to vector<16x256xf32>
    %38 = arith.mulf %37, %27 : vector<16x256xf32>
    %39 = arith.addf %35, %38 : vector<16x256xf32>
    %40 = vector.extract_strided_slice %3 {offsets = [0, 6], sizes = [16, 1], strides = [1, 1]} : vector<16x10xf32> to vector<16x1xf32>
    %41 = vector.broadcast %40 : vector<16x1xf32> to vector<16x256xf32>
    %42 = arith.mulf %41, %32 : vector<16x256xf32>
    %43 = arith.addf %39, %42 : vector<16x256xf32>
    %c16_i32_10 = arith.constant 16 : i32
    %44 = tpu.dynamic_rotate %1 by %c16_i32_10 dim 1 : vector<16x256xf32>, i32 -> vector<16x256xf32>
    %c240_i32_11 = arith.constant 240 : i32
    %45 = tpu.dynamic_rotate %1 by %c240_i32_11 dim 1 : vector<16x256xf32>, i32 -> vector<16x256xf32>
    %46 = arith.select %19, %45, %44 : vector<16x256xi1>, vector<16x256xf32>
    %47 = arith.select %24, %44, %45 : vector<16x256xi1>, vector<16x256xf32>
    %48 = vector.extract_strided_slice %3 {offsets = [0, 1], sizes = [16, 1], strides = [1, 1]} : vector<16x10xf32> to vector<16x1xf32>
    %49 = vector.broadcast %48 : vector<16x1xf32> to vector<16x256xf32>
    %50 = arith.mulf %49, %46 : vector<16x256xf32>
    %51 = arith.addf %43, %50 : vector<16x256xf32>
    %52 = vector.extract_strided_slice %3 {offsets = [0, 4], sizes = [16, 1], strides = [1, 1]} : vector<16x10xf32> to vector<16x1xf32>
    %53 = vector.broadcast %52 : vector<16x1xf32> to vector<16x256xf32>
    %54 = arith.mulf %53, %1 : vector<16x256xf32>
    %55 = arith.addf %51, %54 : vector<16x256xf32>
    %56 = vector.extract_strided_slice %3 {offsets = [0, 7], sizes = [16, 1], strides = [1, 1]} : vector<16x10xf32> to vector<16x1xf32>
    %57 = vector.broadcast %56 : vector<16x1xf32> to vector<16x256xf32>
    %58 = arith.mulf %57, %47 : vector<16x256xf32>
    %59 = arith.addf %55, %58 : vector<16x256xf32>
    %c16_i32_12 = arith.constant 16 : i32
    %60 = tpu.dynamic_rotate %28 by %c16_i32_12 dim 1 : vector<16x256xf32>, i32 -> vector<16x256xf32>
    %c240_i32_13 = arith.constant 240 : i32
    %61 = tpu.dynamic_rotate %28 by %c240_i32_13 dim 1 : vector<16x256xf32>, i32 -> vector<16x256xf32>
    %62 = arith.select %19, %61, %60 : vector<16x256xi1>, vector<16x256xf32>
    %63 = arith.select %24, %60, %61 : vector<16x256xi1>, vector<16x256xf32>
    %64 = vector.extract_strided_slice %3 {offsets = [0, 2], sizes = [16, 1], strides = [1, 1]} : vector<16x10xf32> to vector<16x1xf32>
    %65 = vector.broadcast %64 : vector<16x1xf32> to vector<16x256xf32>
    %66 = arith.mulf %65, %62 : vector<16x256xf32>
    %67 = arith.addf %59, %66 : vector<16x256xf32>
    %68 = vector.extract_strided_slice %3 {offsets = [0, 5], sizes = [16, 1], strides = [1, 1]} : vector<16x10xf32> to vector<16x1xf32>
    %69 = vector.broadcast %68 : vector<16x1xf32> to vector<16x256xf32>
    %70 = arith.mulf %69, %28 : vector<16x256xf32>
    %71 = arith.addf %67, %70 : vector<16x256xf32>
    %72 = vector.extract_strided_slice %3 {offsets = [0, 8], sizes = [16, 1], strides = [1, 1]} : vector<16x10xf32> to vector<16x1xf32>
    %73 = vector.broadcast %72 : vector<16x1xf32> to vector<16x256xf32>
    %74 = arith.mulf %73, %63 : vector<16x256xf32>
    %75 = arith.addf %71, %74 : vector<16x256xf32>
    %76 = vector.extract_strided_slice %3 {offsets = [0, 9], sizes = [16, 1], strides = [1, 1]} : vector<16x10xf32> to vector<16x1xf32>
    %77 = vector.broadcast %76 : vector<16x1xf32> to vector<16x256xf32>
    %78 = arith.subf %75, %77 : vector<16x256xf32>
    %c0_14 = arith.constant 0 : index
    %c0_15 = arith.constant 0 : index
    %c0_16 = arith.constant 0 : index
    %79 = vector.load %arg5[%c0_14, %c0_15, %c0_16] : memref<1x16x256xf32, #tpu.memory_space<vmem>>, vector<1x16x256xf32>
    %80 = vector.shape_cast %79 : vector<1x16x256xf32> to vector<16x256xf32>
    %81 = vector.shape_cast %78 : vector<16x256xf32> to vector<1x16x256xf32>
    tpu.vector_store %arg5[%c0_14, %c0_15, %c0_16], %81 {strides = array<i32>} : memref<1x16x256xf32, #tpu.memory_space<vmem>>, vector<1x16x256xf32>,
    return
  }
  func.func @transform_0(%arg0: i32, %arg1: i32) -> (i32, i32, i32) {
    %c0_i32 = arith.constant 0 : i32
    %c0_i32_0 = arith.constant 0 : i32
    return %arg0, %arg1, %c0_i32 : i32, i32, i32
  }
  func.func @transform_1(%arg0: i32, %arg1: i32) -> (i32, i32, i32) {
    %c0_i32 = arith.constant 0 : i32
    %c0_i32_0 = arith.constant 0 : i32
    return %arg0, %arg1, %c0_i32 : i32, i32, i32
  }
  func.func @transform_2(%arg0: i32, %arg1: i32) -> (i32, i32) {
    %c0_i32 = arith.constant 0 : i32
    %c0_i32_0 = arith.constant 0 : i32
    %c0_i32_1 = arith.constant 0 : i32
    return %c0_i32, %c0_i32_0 : i32, i32
  }
  func.func @transform_3(%arg0: i32, %arg1: i32) -> (i32, i32, i32) {
    %c0_i32 = arith.constant 0 : i32
    %c0_i32_0 = arith.constant 0 : i32
    return %arg0, %arg1, %c0_i32 : i32, i32, i32
  }
}

</mosaic_0001>

<llo_original>
// kernel: tpu_custom_call.1
$region0: #{tpu_custom_call.1}
  #allocation0 [shape = 'u32[]', space=smem, size = 0x4, offset = 0x4, fixed_abs, tag = 'smem constant byte address 0x4 - core index']
  #allocation1 [shape = 'u32[144,128]{1,0:T(1,128)}', space=vmem, size = 0x12000, scoped, tag = 'internal scratch']
  %s0 = inlined_call_operand.hbm [shape: f32[2,16,256], index: 0, kind: input, shape index: {}]
  %s1 = inlined_call_operand.vmem [shape: f32[2,16,10], index: 1, kind: input, shape index: {}]
  %s2 = inlined_call_operand.vmem [shape: s32[4,256], index: 2, kind: input, shape index: {}]
  %s3 = inlined_call_operand.hbm [shape: f32[2,16,256], index: 3, kind: output, shape index: {}]
  %s4 = sld [smem:[#allocation0]]
  $region49: #{tpu_custom_call.1} parent=0
    _
  %s6 = ssub.s32 1, %s4
  %s7 = scalar_select 0, %s6, %s4
  $region1: #{tpu_custom_call.1} parent=0
    #allocation2 [shape = 'u8[32768]{0}', space=vmem, size = 0x8000, scoped, tag = 'input window, operand 0']
    #allocation3 [shape = 's32[2]{0}', space=sflag, size = 0x8, scoped, tag = 'scoped memory for tpu_custom_call.1']
    #allocation4 [shape = 's32[2]{0}', space=sflag, size = 0x8, scoped, tag = 'scoped memory for tpu_custom_call.1']
    #allocation5 [shape = 'u8[32768]{0}', space=vmem, size = 0x8000, scoped, tag = 'output window, operand 0']
    %8 = vsyncpa [#allocation3], 0
    %s9 = scalar_lea.sflag [#allocation3], 1
    %10 = vsyncpa %s9, 0
    %11 = vsyncpa [#allocation4], 0
    %s12 = scalar_lea.sflag [#allocation4], 1
    %13 = vsyncpa %s12, 0
    loop: start=0, step=1, limit=4
    $region2: #{tpu_custom_call.1} parent=1 // loop_pre_header
      _
    $region3: #{tpu_custom_call.1} parent=1 // loop_header
      %s15 = sphi 0, %s19
      %p16 = scmp.ge.s32.totalorder %s15, 4
      %s22 = sphi 0, %s34
      %s23 = sphi 0, %s30
      %s24 = sphi 0, %s22
      %s25 = sphi 0, %s23
      %s26 = sphi 0, %s24
      %s27 = sphi 0, %s25
      %s39 = sphi 0, %s41
      %s42 = sphi 0, %s39
      %s43 = sphi 0, %s42
      %s59 = sphi 0, %s43
      %s67 = sphi 0, %s69
      %s70 = sphi 0, %s67
      %s71 = sphi 0, %s70
      %s87 = sphi 0, %s71
      %s91 = sphi 0, %s91
      %s93 = sphi 0, %s91
      %s94 = sphi 0, %s93
      %s108 = sphi 0, %s94
      %s116 = sphi 0, %s118
      %s119 = sphi 0, %s116
      %s120 = sphi 0, %s119
      %s136 = sphi 0, %s120
    $region4: #{tpu_custom_call.1} parent=1 // loop_header_branch
      %18 = sbr.rel (%p16) target = $region8
    $region5: #{tpu_custom_call.1} parent=1 // loop_body
      %s20 = ssub.s32 %s15, 1
      %s21 = ssub.s32 %s15, 2
      %s28 = sadd.s32 1, %s23
      %p29 = scmp.ge.s32.totalorder %s28, 1
      %s30 = scalar_select %p29, 0, %s28
      %s31 = sadd.s32 1, %s22
      %s32 = scalar_select %p29, %s31, %s22
      %p33 = scmp.ge.s32.totalorder %s32, 2
      %s34 = scalar_select %p33, 0, %s32
      %s35 = ssub.s32 %s22, %s34
      %s36 = ssub.s32 %s23, %s30
      %s37 = sor.u32 %s35, %s36
      %p38 = scmp.eq.s32.totalorder %s37, 0
      %s40 = sadd.s32 %s39, 1
      %s41 = scalar_select %p38, %s39, %s40
      %p44 = pneg %p38
      %p45 = scmp.eq.s32.totalorder %s15, 1
      %p46 = por %p44, %p45
      %p47 = scmp.ne.s32.totalorder %s39, %s42
      %p48 = scmp.eq.s32.totalorder %s15, 0
      %p49 = por %p47, %p48
      %p50 = scmp.ne.s32.totalorder %s39, %s42
      %p51 = scmp.eq.s32.totalorder %s20, 1
      %p52 = por %p50, %p51
      %p53 = scmp.ne.s32.totalorder %s42, %s43
      %p54 = scmp.eq.s32.totalorder %s20, 0
      %p55 = por %p53, %p54
      %p56 = scmp.ne.s32.totalorder %s42, %s43
      %p57 = scmp.eq.s32.totalorder %s21, 1
      %p58 = por %p56, %p57
      %p60 = scmp.ne.s32.totalorder %s43, %s59
      %p61 = scmp.eq.s32.totalorder %s21, 0
      %p62 = por %p60, %p61
      %s63 = ssub.s32 %s22, %s34
      %s64 = ssub.s32 %s23, %s30
      %s65 = sor.u32 %s63, %s64
      %p66 = scmp.eq.s32.totalorder %s65, 0
      %s68 = sadd.s32 %s67, 1
      %s69 = scalar_select %p66, %s67, %s68
      %p72 = pneg %p66
      %p73 = scmp.eq.s32.totalorder %s15, 1
      %p74 = por %p72, %p73
      %p75 = scmp.ne.s32.totalorder %s67, %s70
      %p76 = scmp.eq.s32.totalorder %s15, 0
      %p77 = por %p75, %p76
      %p78 = scmp.ne.s32.totalorder %s67, %s70
      %p79 = scmp.eq.s32.totalorder %s20, 1
      %p80 = por %p78, %p79
      %p81 = scmp.ne.s32.totalorder %s70, %s71
      %p82 = scmp.eq.s32.totalorder %s20, 0
      %p83 = por %p81, %p82
      %p84 = scmp.ne.s32.totalorder %s70, %s71
      %p85 = scmp.eq.s32.totalorder %s21, 1
      %p86 = por %p84, %p85
      %p88 = scmp.ne.s32.totalorder %s71, %s87
      %p89 = scmp.eq.s32.totalorder %s21, 0
      %p90 = por %p88, %p89
      %s92 = sadd.s32 %s91, 1
      %p95 = scmp.eq.s32.totalorder %s15, 1
      %p96 = scmp.ne.s32.totalorder %s91, %s93
      %p97 = scmp.eq.s32.totalorder %s15, 0
      %p98 = por %p96, %p97
      %p99 = scmp.ne.s32.totalorder %s91, %s93
      %p100 = scmp.eq.s32.totalorder %s20, 1
      %p101 = por %p99, %p100
      %p102 = scmp.ne.s32.totalorder %s93, %s94
      %p103 = scmp.eq.s32.totalorder %s20, 0
      %p104 = por %p102, %p103
      %p105 = scmp.ne.s32.totalorder %s93, %s94
      %p106 = scmp.eq.s32.totalorder %s21, 1
      %p107 = por %p105, %p106
      %p109 = scmp.ne.s32.totalorder %s94, %s108
      %p110 = scmp.eq.s32.totalorder %s21, 0
      %p111 = por %p109, %p110
      %s112 = ssub.s32 %s22, %s34
      %s113 = ssub.s32 %s23, %s30
      %s114 = sor.u32 %s112, %s113
      %p115 = scmp.eq.s32.totalorder %s114, 0
      %s117 = sadd.s32 %s116, 1
      %s118 = scalar_select %p115, %s116, %s117
      %p121 = pneg %p115
      %p122 = scmp.eq.s32.totalorder %s15, 1
      %p123 = por %p121, %p122
      %p124 = scmp.ne.s32.totalorder %s116, %s119
      %p125 = scmp.eq.s32.totalorder %s15, 0
      %p126 = por %p124, %p125
      %p127 = scmp.ne.s32.totalorder %s116, %s119
      %p128 = scmp.eq.s32.totalorder %s20, 1
      %p129 = por %p127, %p128
      %p130 = scmp.ne.s32.totalorder %s119, %s120
      %p131 = scmp.eq.s32.totalorder %s20, 0
      %p132 = por %p130, %p131
      %p133 = scmp.ne.s32.totalorder %s119, %s120
      %p134 = scmp.eq.s32.totalorder %s21, 1
      %p135 = por %p133, %p134
      %p137 = scmp.ne.s32.totalorder %s120, %s136
      %p138 = scmp.eq.s32.totalorder %s21, 0
      %p139 = por %p137, %p138
      %p140 = scmp.le.s32.totalorder 1, %s15
      %p141 = scmp.lt.s32.totalorder %s15, 3
      %p142 = pnand %p140, %p141
      %p143 = pneg %p142
      // Predicated region
      $region9: #{tpu_custom_call.1} parent=5 // pred_check
        _
      $region10: #{tpu_custom_call.1} parent=5 // pred_check_branch
        %145 = sbr.rel (%p142) target = $region12
      $region11: #{tpu_custom_call.1} parent=5 // pred_region
        %s146 = ssub.s32 %s15, 1
        // Predicated region
        $region13: #{tpu_custom_call.1} parent=11 // pred_check
          %p147 = pneg %p104
        $region14: #{tpu_custom_call.1} parent=11 // pred_check_branch
          %149 = sbr.rel (%p147) target = $region16
        $region15: #{tpu_custom_call.1} parent=11 // pred_region
          _
        $region16: #{tpu_custom_call.1} parent=11 // pred_fallthru
          _
      $region12: #{tpu_custom_call.1} parent=5 // pred_fallthru
        _
      %p150 = scmp.lt.s32.totalorder %s15, 2
      // Predicated region
      $region17: #{tpu_custom_call.1} parent=5 // pred_check
        %p151 = pneg %p150
      $region18: #{tpu_custom_call.1} parent=5 // pred_check_branch
        %153 = sbr.rel (%p151) target = $region20
      $region19: #{tpu_custom_call.1} parent=5 // pred_region
        // Predicated region
        $region21: #{tpu_custom_call.1} parent=19 // pred_check
          %p154 = pneg %p49
        $region22: #{tpu_custom_call.1} parent=19 // pred_check_branch
          %156 = sbr.rel (%p154) target = $region24
        $region23: #{tpu_custom_call.1} parent=19 // pred_region
          %s157 = sand.u32 %s39, 1
          %s158 = scalar_lea.sflag [#allocation3], %s157
          %s159 = sand.u32 %s39, 1
          %s160 = smul.addr %s159, 32
          %s161 = scalar_lea.vmem [#allocation2], %s160
          %s162 = smul.u32 2, %s23
          %s164 = ssub.s32 512, 512
          %165 = vsyncadd %s158, %s164
          %s166 = smul.addr %s162, 2
          %s167 = smul.addr %s22, 4
          %s168 = sadd.s32 %s166, %s167
          %s169 = smul.addr %s168, 128
          %s170 = scalar_lea.hbm %s0, %s169
          %s171 = sshll.u32 %s161, 4
          %s172 = int_to_ptr.vmem [resolvable:$true] %s171
          %177 = dma.hbm_to_vmem [thread:$0]  %s170, 512, %s172, %s158, 256, 256, 16
        $region24: #{tpu_custom_call.1} parent=19 // pred_fallthru
          _
        // Predicated region
        $region25: #{tpu_custom_call.1} parent=19 // pred_check
          %p178 = pneg %p77
        $region26: #{tpu_custom_call.1} parent=19 // pred_check_branch
          %180 = sbr.rel (%p178) target = $region28
        $region27: #{tpu_custom_call.1} parent=19 // pred_region
          %s181 = smul.u32 2, %s23
          %p182 = scmp.lt.s32.totalorder %s22, 1
          %s183 = scalar_select %p182, %s22, 1
          %p184 = scmp.lt.s32.totalorder %s181, 1
          %s185 = scalar_select %p184, %s181, 1
          %s186 = smul.addr %s183, 2
          %s187 = sadd.s32 %s185, %s186
          %s188 = smul.addr %s187, 8
          %s189 = scalar_lea.vmem %s1, %s188
          %s190 = smul.u32 2, %s23
        $region28: #{tpu_custom_call.1} parent=19 // pred_fallthru
          _
      $region20: #{tpu_custom_call.1} parent=5 // pred_fallthru
        _
      %p191 = scmp.le.s32.totalorder 1, %s15
      %p192 = scmp.lt.s32.totalorder %s15, 3
      %p193 = pnand %p191, %p192
      %p194 = pneg %p193
      // Predicated region
      $region29: #{tpu_custom_call.1} parent=5 // pred_check
        _
      $region30: #{tpu_custom_call.1} parent=5 // pred_check_branch
        %196 = sbr.rel (%p193) target = $region32
      $region31: #{tpu_custom_call.1} parent=5 // pred_region
        %s197 = ssub.s32 %s15, 1
        %s198 = sand.u32 %s42, 1
        %s199 = scalar_lea.sflag [#allocation3], %s198
        %s200 = sand.u32 %s42, 1
        %s201 = smul.addr %s200, 32
        %s202 = scalar_lea.vmem [#allocation2], %s201
        // Predicated region
        $region33: #{tpu_custom_call.1} parent=31 // pred_check
          %p203 = pneg %p55
        $region34: #{tpu_custom_call.1} parent=31 // pred_check_branch
          %205 = sbr.rel (%p203) target = $region36
        $region35: #{tpu_custom_call.1} parent=31 // pred_region
          %206 = dma.done %s199, 512
        $region36: #{tpu_custom_call.1} parent=31 // pred_fallthru
          _
        %s207 = sand.u32 %s42, 1
        %s208 = scalar_lea.sflag [#allocation3], %s207
        %s209 = sand.u32 %s42, 1
        %s210 = smul.addr %s209, 32
        %s211 = scalar_lea.vmem [#allocation2], %s210
        %p212 = pneg %p55
        %p213 = pneg %p52
        %s214 = smul.u32 2, %s25
        %p215 = scmp.lt.s32.totalorder %s24, 1
        %s216 = scalar_select %p215, %s24, 1
        %p217 = scmp.lt.s32.totalorder %s214, 1
        %s218 = scalar_select %p217, %s214, 1
        %s219 = smul.addr %s216, 2
        %s220 = sadd.s32 %s218, %s219
        %s221 = smul.addr %s220, 8
        %s222 = scalar_lea.vmem %s1, %s221
        %p223 = pneg %p83
        %p224 = pneg %p80
        %p225 = pneg %p104
        %p226 = pneg %p101
        %p227 = pneg %p132
        %p228 = pneg %p129
        %s229 = sand.u32 %s119, 1
        %s230 = scalar_lea.sflag [#allocation4], %s229
        %s231 = sand.u32 %s119, 1
        %s232 = smul.addr %s231, 32
        %s233 = scalar_lea.vmem [#allocation5], %s232
        %s234 = smul.u32 2, %s25
        %s235 = smul.u32 2, %s25
        %p236 = scmp.lt.s32.totalorder %s24, 1
        %s237 = scalar_select %p236, %s24, 1
        %p238 = scmp.lt.s32.totalorder %s235, 1
        %s239 = scalar_select %p238, %s235, 1
        %s240 = smul.addr %s237, 2
        %s241 = sadd.s32 %s239, %s240
        %s242 = smul.addr %s241, 8
        %s243 = scalar_lea.vmem %s1, %s242
        %s244 = smul.u32 2, %s25
        %s245 = smul.u32 2, %s25
        %v246 = vld [vmem:[%s202] sm:$0xff]
        %v247 = vld [vmem:[%s202 + $0x8] sm:$0xff]
        %v248 = vld [vmem:[%s202 + $0x10] sm:$0xff]
        %v249 = vld [vmem:[%s202 + $0x18] sm:$0xff]
        %v250 = vld [vmem:[%s243] sm:$0xff]
        %v251 = vld [vmem:[%s243 + $0x8] sm:$0xff]
        %v252 = vld [vmem:[%s2] sm:$0xff]
        %v253 = vlaneseq
        %v254 = vshrl.u32 %v253, 7
        %v255 = vsub.s32 0, %v254
        %v256 = vrot.slane %v252, %v255
        %v257 = vlaneseq
        %v258 = vshrl.u32 %v257, 7
        %v259 = vsub.s32 4, %v258
        %v260 = vrot.slane %v252, %v259
        %v261 = vlaneseq
        %v262 = vshrl.u32 %v261, 7
        %v263 = vsub.s32 0, %v262
        %v264 = vrot.slane %v256, %v263
        %v265 = vlaneseq
        %v266 = vshrl.u32 %v265, 7
        %v267 = vsub.s32 0, %v266
        %v268 = vrot.slane %v260, %v267
        %vm269 = vcmp.ne.s32.totalorder %v264, 0
        %vm270 = vcmp.ne.s32.totalorder %v268, 0
        %v271 = vlaneseq
        %v272 = vshrl.u32 %v271, 7
        %v273 = vsub.s32 1, %v272
        %v274 = vrot.slane %v252, %v273
        %v275 = vlaneseq
        %v276 = vshrl.u32 %v275, 7
        %v277 = vsub.s32 5, %v276
        %v278 = vrot.slane %v252, %v277
        %v279 = vlaneseq
        %v280 = vshrl.u32 %v279, 7
        %v281 = vsub.s32 1, %v280
        %v282 = vrot.slane %v274, %v281
        %v283 = vlaneseq
        %v284 = vshrl.u32 %v283, 7
        %v285 = vsub.s32 1, %v284
        %v286 = vrot.slane %v278, %v285
        %vm287 = vcmp.ne.s32.totalorder %v282, 0
        %vm288 = vcmp.ne.s32.totalorder %v286, 0
        %v289 = vlaneseq
        %v290 = vshrl.u32 %v289, 7
        %v291 = vsub.s32 2, %v290
        %v292 = vrot.slane %v252, %v291
        %v293 = vlaneseq
        %v294 = vshrl.u32 %v293, 7
        %v295 = vsub.s32 6, %v294
        %v296 = vrot.slane %v252, %v295
        %v297 = vlaneseq
        %v298 = vshrl.u32 %v297, 7
        %v299 = vsub.s32 2, %v298
        %v300 = vrot.slane %v292, %v299
        %v301 = vlaneseq
        %v302 = vshrl.u32 %v301, 7
        %v303 = vsub.s32 2, %v302
        %v304 = vrot.slane %v296, %v303
        %vm305 = vcmp.ne.s32.totalorder %v300, 0
        %vm306 = vcmp.ne.s32.totalorder %v304, 0
        %v307 = vlaneseq
        %v308 = vshrl.u32 %v307, 7
        %v309 = vsub.s32 3, %v308
        %v310 = vrot.slane %v252, %v309
        %v311 = vlaneseq
        %v312 = vshrl.u32 %v311, 7
        %v313 = vsub.s32 7, %v312
        %v314 = vrot.slane %v252, %v313
        %v315 = vlaneseq
        %v316 = vshrl.u32 %v315, 7
        %v317 = vsub.s32 3, %v316
        %v318 = vrot.slane %v310, %v317
        %v319 = vlaneseq
        %v320 = vshrl.u32 %v319, 7
        %v321 = vsub.s32 3, %v320
        %v322 = vrot.slane %v314, %v321
        %vm323 = vcmp.ne.s32.totalorder %v318, 0
        %vm324 = vcmp.ne.s32.totalorder %v322, 0
        %325 = vrot.lane.b32.xlu0 %v246, 1
        %v326 = vpop.permute.xlu0 %325
        %327 = vrot.lane.b32.xlu0 %v248, 1
        %v328 = vpop.permute.xlu0 %327
        %329 = vrot.lane.b32.xlu0 %v247, 1
        %v330 = vpop.permute.xlu0 %329
        %331 = vrot.lane.b32.xlu0 %v249, 1
        %v332 = vpop.permute.xlu0 %331
        %v333 = vlaneseq
        %v334 = vand.u32 %v333, 127
        %vm335 = vcmp.lt.s32.totalorder %v334, 1
        %v336 = vsel %vm335, %v326, %v330
        %v337 = vsel %vm335, %v328, %v332
        %v338 = vsel %vm335, %v330, %v326
        %v339 = vsel %vm335, %v332, %v328
        %340 = vrot.lane.b32.xlu0 %v246, 127
        %v341 = vpop.permute.xlu0 %340
        %342 = vrot.lane.b32.xlu0 %v248, 127
        %v343 = vpop.permute.xlu0 %342
        %344 = vrot.lane.b32.xlu0 %v247, 127
        %v345 = vpop.permute.xlu0 %344
        %346 = vrot.lane.b32.xlu0 %v249, 127
        %v347 = vpop.permute.xlu0 %346
        %vm348 = vcmp.lt.s32.totalorder %v334, 127
        %v349 = vsel %vm348, %v341, %v345
        %v350 = vsel %vm348, %v343, %v347
        %v351 = vsel %vm348, %v345, %v341
        %v352 = vsel %vm348, %v347, %v343
        %v353 = vsel %vm269, %v349, %v338
        %v354 = vsel %vm270, %v351, %v336
        %v355 = vsel %vm269, %v350, %v339
        %v356 = vsel %vm270, %v352, %v337
        %v357 = vsel %vm287, %v338, %v349
        %v358 = vsel %vm288, %v336, %v351
        %v359 = vsel %vm287, %v339, %v350
        %v360 = vsel %vm288, %v337, %v352
        %361 = vrot.lane.b32.xlu0 %v353, 16
        %v362 = vpop.permute.xlu0 %361
        %363 = vrot.lane.b32.xlu0 %v355, 16
        %v364 = vpop.permute.xlu0 %363
        %365 = vrot.lane.b32.xlu0 %v354, 16
        %v366 = vpop.permute.xlu0 %365
        %367 = vrot.lane.b32.xlu0 %v356, 16
        %v368 = vpop.permute.xlu0 %367
        %vm369 = vcmp.lt.s32.totalorder %v334, 16
        %v370 = vsel %vm369, %v362, %v366
        %v371 = vsel %vm369, %v364, %v368
        %v372 = vsel %vm369, %v366, %v362
        %v373 = vsel %vm369, %v368, %v364
        %374 = vrot.lane.b32.xlu0 %v353, 112
        %v375 = vpop.permute.xlu0 %374
        %376 = vrot.lane.b32.xlu0 %v355, 112
        %v377 = vpop.permute.xlu0 %376
        %378 = vrot.lane.b32.xlu0 %v354, 112
        %v379 = vpop.permute.xlu0 %378
        %380 = vrot.lane.b32.xlu0 %v356, 112
        %v381 = vpop.permute.xlu0 %380
        %vm382 = vcmp.lt.s32.totalorder %v334, 112
        %v383 = vsel %vm382, %v375, %v379
        %v384 = vsel %vm382, %v377, %v381
        %v385 = vsel %vm382, %v379, %v375
        %v386 = vsel %vm382, %v381, %v377
        %v387 = vsel %vm305, %v383, %v372
        %v388 = vsel %vm306, %v385, %v370
        %v389 = vsel %vm305, %v384, %v373
        %v390 = vsel %vm306, %v386, %v371
        %v391 = vsel %vm323, %v372, %v383
        %v392 = vsel %vm324, %v370, %v385
        %v393 = vsel %vm323, %v373, %v384
        %v394 = vsel %vm324, %v371, %v386
        %396 = vset.pattern.permute.xlu0 0
        %397 = vperm.xlu0 %396, %v250
        %v398 = vpop.permute.xlu0 %397
        %401 = vset.pattern.permute.xlu0 0
        %402 = vperm.xlu0 %401, %v251
        %v403 = vpop.permute.xlu0 %402
        %v405 = vmul.f32 %v398, %v387
        %v406 = vmul.f32 %v398, %v388
        %v407 = vmul.f32 %v403, %v389
        %v408 = vmul.f32 %v403, %v390
        %409 = vset.pattern.permute.xlu0 3
        %410 = vperm.xlu0 %409, %v250
        %v411 = vpop.permute.xlu0 %410
        %413 = vset.pattern.permute.xlu0 3
        %414 = vperm.xlu0 %413, %v251
        %v415 = vpop.permute.xlu0 %414
        %v417 = vmul.f32 %v411, %v353
        %v418 = vmul.f32 %v411, %v354
        %v419 = vmul.f32 %v415, %v355
        %v420 = vmul.f32 %v415, %v356
        %v421 = vadd.f32 %v405, %v417
        %v422 = vadd.f32 %v406, %v418
        %v423 = vadd.f32 %v407, %v419
        %v424 = vadd.f32 %v408, %v420
        %425 = vset.pattern.permute.xlu0 6
        %426 = vperm.xlu0 %425, %v250
        %v427 = vpop.permute.xlu0 %426
        %429 = vset.pattern.permute.xlu0 6
        %430 = vperm.xlu0 %429, %v251
        %v431 = vpop.permute.xlu0 %430
        %v433 = vmul.f32 %v427, %v391
        %v434 = vmul.f32 %v427, %v392
        %v435 = vmul.f32 %v431, %v393
        %v436 = vmul.f32 %v431, %v394
        %v437 = vadd.f32 %v421, %v433
        %v438 = vadd.f32 %v422, %v434
        %v439 = vadd.f32 %v423, %v435
        %v440 = vadd.f32 %v424, %v436
        %441 = vrot.lane.b32.xlu0 %v246, 16
        %v442 = vpop.permute.xlu0 %441
        %443 = vrot.lane.b32.xlu0 %v248, 16
        %v444 = vpop.permute.xlu0 %443
        %445 = vrot.lane.b32.xlu0 %v247, 16
        %v446 = vpop.permute.xlu0 %445
        %447 = vrot.lane.b32.xlu0 %v249, 16
        %v448 = vpop.permute.xlu0 %447
        %v449 = vsel %vm369, %v442, %v446
        %v450 = vsel %vm369, %v444, %v448
        %v451 = vsel %vm369, %v446, %v442
        %v452 = vsel %vm369, %v448, %v444
        %453 = vrot.lane.b32.xlu0 %v246, 112
        %v454 = vpop.permute.xlu0 %453
        %455 = vrot.lane.b32.xlu0 %v248, 112
        %v456 = vpop.permute.xlu0 %455
        %457 = vrot.lane.b32.xlu0 %v247, 112
        %v458 = vpop.permute.xlu0 %457
        %459 = vrot.lane.b32.xlu0 %v249, 112
        %v460 = vpop.permute.xlu0 %459
        %v461 = vsel %vm382, %v454, %v458
        %v462 = vsel %vm382, %v456, %v460
        %v463 = vsel %vm382, %v458, %v454
        %v464 = vsel %vm382, %v460, %v456
        %v465 = vsel %vm305, %v461, %v451
        %v466 = vsel %vm306, %v463, %v449
        %v467 = vsel %vm305, %v462, %v452
        %v468 = vsel %vm306, %v464, %v450
        %v469 = vsel %vm323, %v451, %v461
        %v470 = vsel %vm324, %v449, %v463
        %v471 = vsel %vm323, %v452, %v462
        %v472 = vsel %vm324, %v450, %v464
        %473 = vset.pattern.permute.xlu0 1
        %474 = vperm.xlu0 %473, %v250
        %v475 = vpop.permute.xlu0 %474
        %477 = vset.pattern.permute.xlu0 1
        %478 = vperm.xlu0 %477, %v251
        %v479 = vpop.permute.xlu0 %478
        %v481 = vmul.f32 %v475, %v465
        %v482 = vmul.f32 %v475, %v466
        %v483 = vmul.f32 %v479, %v467
        %v484 = vmul.f32 %v479, %v468
        %v485 = vadd.f32 %v437, %v481
        %v486 = vadd.f32 %v438, %v482
        %v487 = vadd.f32 %v439, %v483
        %v488 = vadd.f32 %v440, %v484
        %489 = vset.pattern.permute.xlu0 4
        %490 = vperm.xlu0 %489, %v250
        %v491 = vpop.permute.xlu0 %490
        %493 = vset.pattern.permute.xlu0 4
        %494 = vperm.xlu0 %493, %v251
        %v495 = vpop.permute.xlu0 %494
        %v497 = vmul.f32 %v491, %v246
        %v498 = vmul.f32 %v491, %v247
        %v499 = vmul.f32 %v495, %v248
        %v500 = vmul.f32 %v495, %v249
        %v501 = vadd.f32 %v485, %v497
        %v502 = vadd.f32 %v486, %v498
        %v503 = vadd.f32 %v487, %v499
        %v504 = vadd.f32 %v488, %v500
        %505 = vset.pattern.permute.xlu0 7
        %506 = vperm.xlu0 %505, %v250
        %v507 = vpop.permute.xlu0 %506
        %509 = vset.pattern.permute.xlu0 7
        %510 = vperm.xlu0 %509, %v251
        %v511 = vpop.permute.xlu0 %510
        %v513 = vmul.f32 %v507, %v469
        %v514 = vmul.f32 %v507, %v470
        %v515 = vmul.f32 %v511, %v471
        %v516 = vmul.f32 %v511, %v472
        %v517 = vadd.f32 %v501, %v513
        %v518 = vadd.f32 %v502, %v514
        %v519 = vadd.f32 %v503, %v515
        %v520 = vadd.f32 %v504, %v516
        %521 = vrot.lane.b32.xlu0 %v357, 16
        %v522 = vpop.permute.xlu0 %521
        %523 = vrot.lane.b32.xlu0 %v359, 16
        %v524 = vpop.permute.xlu0 %523
        %525 = vrot.lane.b32.xlu0 %v358, 16
        %v526 = vpop.permute.xlu0 %525
        %527 = vrot.lane.b32.xlu0 %v360, 16
        %v528 = vpop.permute.xlu0 %527
        %v529 = vsel %vm369, %v522, %v526
        %v530 = vsel %vm369, %v524, %v528
        %v531 = vsel %vm369, %v526, %v522
        %v532 = vsel %vm369, %v528, %v524
        %533 = vrot.lane.b32.xlu0 %v357, 112
        %v534 = vpop.permute.xlu0 %533
        %535 = vrot.lane.b32.xlu0 %v359, 112
        %v536 = vpop.permute.xlu0 %535
        %537 = vrot.lane.b32.xlu0 %v358, 112
        %v538 = vpop.permute.xlu0 %537
        %539 = vrot.lane.b32.xlu0 %v360, 112
        %v540 = vpop.permute.xlu0 %539
        %v541 = vsel %vm382, %v534, %v538
        %v542 = vsel %vm382, %v536, %v540
        %v543 = vsel %vm382, %v538, %v534
        %v544 = vsel %vm382, %v540, %v536
        %v545 = vsel %vm305, %v541, %v531
        %v546 = vsel %vm306, %v543, %v529
        %v547 = vsel %vm305, %v542, %v532
        %v548 = vsel %vm306, %v544, %v530
        %v549 = vsel %vm323, %v531, %v541
        %v550 = vsel %vm324, %v529, %v543
        %v551 = vsel %vm323, %v532, %v542
        %v552 = vsel %vm324, %v530, %v544
        %553 = vset.pattern.permute.xlu0 2
        %554 = vperm.xlu0 %553, %v250
        %v555 = vpop.permute.xlu0 %554
        %557 = vset.pattern.permute.xlu0 2
        %558 = vperm.xlu0 %557, %v251
        %v559 = vpop.permute.xlu0 %558
        %v561 = vmul.f32 %v555, %v545
        %v562 = vmul.f32 %v555, %v546
        %v563 = vmul.f32 %v559, %v547
        %v564 = vmul.f32 %v559, %v548
        %v565 = vadd.f32 %v517, %v561
        %v566 = vadd.f32 %v518, %v562
        %v567 = vadd.f32 %v519, %v563
        %v568 = vadd.f32 %v520, %v564
        %569 = vset.pattern.permute.xlu0 5
        %570 = vperm.xlu0 %569, %v250
        %v571 = vpop.permute.xlu0 %570
        %573 = vset.pattern.permute.xlu0 5
        %574 = vperm.xlu0 %573, %v251
        %v575 = vpop.permute.xlu0 %574
        %v577 = vmul.f32 %v571, %v357
        %v578 = vmul.f32 %v571, %v358
        %v579 = vmul.f32 %v575, %v359
        %v580 = vmul.f32 %v575, %v360
        %v581 = vadd.f32 %v565, %v577
        %v582 = vadd.f32 %v566, %v578
        %v583 = vadd.f32 %v567, %v579
        %v584 = vadd.f32 %v568, %v580
        %585 = vset.pattern.permute.xlu0 8
        %586 = vperm.xlu0 %585, %v250
        %v587 = vpop.permute.xlu0 %586
        %589 = vset.pattern.permute.xlu0 8
        %590 = vperm.xlu0 %589, %v251
        %v591 = vpop.permute.xlu0 %590
        %v593 = vmul.f32 %v587, %v549
        %v594 = vmul.f32 %v587, %v550
        %v595 = vmul.f32 %v591, %v551
        %v596 = vmul.f32 %v591, %v552
        %v597 = vadd.f32 %v581, %v593
        %v598 = vadd.f32 %v582, %v594
        %v599 = vadd.f32 %v583, %v595
        %v600 = vadd.f32 %v584, %v596
        %601 = vset.pattern.permute.xlu0 9
        %602 = vperm.xlu0 %601, %v250
        %v603 = vpop.permute.xlu0 %602
        %605 = vset.pattern.permute.xlu0 9
        %606 = vperm.xlu0 %605, %v251
        %v607 = vpop.permute.xlu0 %606
        %v609 = vsub.f32 %v597, %v603
        %v610 = vsub.f32 %v598, %v603
        %v611 = vsub.f32 %v599, %v607
        %v612 = vsub.f32 %v600, %v607
        %613 = vst [vmem:[%s233] sm:$0xff] %v609
        %614 = vst [vmem:[%s233 + $0x8] sm:$0xff] %v610
        %615 = vst [vmem:[%s233 + $0x10] sm:$0xff] %v611
        %616 = vst [vmem:[%s233 + $0x18] sm:$0xff] %v612
        %s617 = sand.u32 %s119, 1
        %s618 = scalar_lea.sflag [#allocation4], %s617
        %s619 = sand.u32 %s119, 1
        %s620 = smul.addr %s619, 32
        %s621 = scalar_lea.vmem [#allocation5], %s620
        // Predicated region
        $region37: #{tpu_custom_call.1} parent=31 // pred_check
          %p622 = pneg %p129
        $region38: #{tpu_custom_call.1} parent=31 // pred_check_branch
          %624 = sbr.rel (%p622) target = $region40
        $region39: #{tpu_custom_call.1} parent=31 // pred_region
          %s625 = smul.u32 2, %s25
          %s627 = ssub.s32 512, 512
          %628 = vsyncadd %s618, %s627
          %s629 = smul.addr %s625, 2
          %s630 = smul.addr %s24, 4
          %s631 = sadd.s32 %s629, %s630
          %s632 = smul.addr %s631, 128
          %s633 = scalar_lea.hbm %s3, %s632
          %s634 = sshll.u32 %s621, 4
          %s635 = int_to_ptr.vmem [resolvable:$true] %s634
          %640 = dma.vmem_to_hbm [thread:$0]  %s635, 512, %s633, %s618, 256, 256, 16
        $region40: #{tpu_custom_call.1} parent=31 // pred_fallthru
          _
      $region32: #{tpu_custom_call.1} parent=5 // pred_fallthru
        _
      %p641 = scmp.le.s32.totalorder 2, %s15
      // Predicated region
      $region41: #{tpu_custom_call.1} parent=5 // pred_check
        %p642 = pneg %p641
      $region42: #{tpu_custom_call.1} parent=5 // pred_check_branch
        %644 = sbr.rel (%p642) target = $region44
      $region43: #{tpu_custom_call.1} parent=5 // pred_region
        %s645 = ssub.s32 %s15, 2
        // Predicated region
        $region45: #{tpu_custom_call.1} parent=43 // pred_check
          %p646 = pneg %p135
        $region46: #{tpu_custom_call.1} parent=43 // pred_check_branch
          %648 = sbr.rel (%p646) target = $region48
        $region47: #{tpu_custom_call.1} parent=43 // pred_region
          %s649 = sand.u32 %s120, 1
          %s650 = scalar_lea.sflag [#allocation4], %s649
          %s651 = sand.u32 %s120, 1
          %s652 = smul.addr %s651, 32
          %s653 = scalar_lea.vmem [#allocation5], %s652
          %654 = dma.done %s650, 512
        $region48: #{tpu_custom_call.1} parent=43 // pred_fallthru
          _
      $region44: #{tpu_custom_call.1} parent=5 // pred_fallthru
        _
    $region6: #{tpu_custom_call.1} parent=1 // loop_footer
      %s19 = sadd.s32 1, %s15
    $region7: #{tpu_custom_call.1} parent=1 // loop_footer_branch
      %14 = sbr.rel target = $region3
    $region8: #{tpu_custom_call.1} parent=1 // loop_exit
      _
    %655 = vsyncpa [#allocation3], 1
    %s656 = scalar_lea.sflag [#allocation3], 1
    %657 = vsyncpa %s656, 1
    %658 = vsyncpa [#allocation4], 1
    %s659 = scalar_lea.sflag [#allocation4], 1
    %660 = vsyncpa %s659, 1

</llo_original>
